<compile_context>
chip_gen: v5e
topology: v5e:2x2
jax: 0.10.0
libtpu: 0.0.40
codegen_flags: <defaults>
</compile_context>

<pallas_src>
import functools

import jax
import jax.numpy as jnp
from jax import lax
from jax.experimental import pallas as pl
from jax.experimental.pallas import tpu as pltpu


def _round_up(x, m):
    return ((x + m - 1) // m) * m


def _miou_kernel(x_ref, t_ref, w_ref,
                 inters_ref, unions_ref, loss_ref, wsum_ref,
                 acc_i, acc_u, acc_l, acc_w,
                 *, hw, tp, n_blk_p, need_mask):
    j = pl.program_id(2)

    @pl.when(j == 0)
    def _():
        acc_i[...] = jnp.zeros_like(acc_i)
        acc_u[...] = jnp.zeros_like(acc_u)
        acc_l[...] = jnp.zeros_like(acc_l)
        acc_w[...] = jnp.zeros_like(acc_w)

    x = x_ref[...].astype(jnp.float32)                      # (C, tp) logits, class on sublanes
    t = t_ref[...]                                          # (1, tp) int32 target class ids
    w = w_ref[...]                                          # (C, 1) class weights
    C = x.shape[0]

    if need_mask:
        p = pl.program_id(1)
        g = p * n_blk_p + j                                 # (unclamped) global pixel block
        lane = lax.broadcasted_iota(jnp.int32, (1, tp), 1)
        valid = (g * tp + lane) < hw                        # (1, tp) pixel-validity mask
        x = jnp.where(valid, x, 0.0)                        # keep per-lane softmax finite

    # softmax / log_softmax over the class (sublane) axis, numerically stable
    m = jnp.max(x, axis=0, keepdims=True)                   # (1, tp)  XLU
    e = jnp.exp(x - m)                                      # (C, tp)  EUP
    s = jnp.sum(e, axis=0, keepdims=True)                   # (1, tp)  XLU
    inv_s = pl.reciprocal(s, approx=True)                   # (1, tp)  EUP
    inv_s = inv_s * (2.0 - s * inv_s)                       # one Newton step (cheap, per-pixel)
    softs = e * inv_s                                       # (C, tp)  softmax probs
    logp = (x - m) - jnp.log(s)                             # (C, tp)  log_softmax

    cls = lax.broadcasted_iota(jnp.int32, (C, tp), 0)
    onehot = cls == t                                       # (C, tp) one-hot target mask
    if need_mask:
        onehot = jnp.logical_and(onehot, valid)
        softs = jnp.where(valid, softs, 0.0)                # invalid pixels contribute nothing

    # select-based accumulation (VPU); cross-lane reductions deferred to the epilogue
    acc_i[...] += jnp.where(onehot, softs, 0.0)             # intersection = p * m
    acc_u[...] += jnp.where(onehot, 1.0, softs)             # union = p + m - p*m
    ow = jnp.where(onehot, w, 0.0)                          # picked class weight (C, tp)
    acc_l[...] += jnp.sum(ow * logp, axis=0, keepdims=True)  # (1, tp) weighted picked log-prob
    acc_w[...] += jnp.sum(ow, axis=0, keepdims=True)         # (1, tp) picked weight

    @pl.when(j == pl.num_programs(2) - 1)
    def _():
        inters_ref[...] = jnp.sum(acc_i[...], axis=1, keepdims=True)   # (C, 1)
        unions_ref[...] = jnp.sum(acc_u[...], axis=1, keepdims=True)   # (C, 1)
        loss_ref[...] = (-jnp.sum(acc_l[...])).reshape(1, 1)           # NLL numerator
        wsum_ref[...] = jnp.sum(acc_w[...]).reshape(1, 1)              # NLL denominator


@functools.partial(jax.jit, static_argnames=("tp",))
def miou_loss_2d(inputs, targets, class_weight=None, *, tp=None):
    """inputs: (N, C, H, W) float; targets: (N, H, W) int; class_weight: (C,) float or None."""
    N, C, H, W = inputs.shape
    HW = H * W

    x = inputs.reshape(N, C, HW)                    # pure reshape: no transpose / pad / cast
    t = targets.reshape(N, 1, HW).astype(jnp.int32)
    if class_weight is None:
        class_weight = jnp.ones((C,), jnp.float32)
    w = class_weight.reshape(C, 1).astype(jnp.float32)

    # --- pixel tile derived from a VMEM budget (binding case: v7x 64 MiB / 32 MiB scoped) ---
    in_item = jnp.dtype(inputs.dtype).itemsize
    c_pad = _round_up(C, 8)
    # VMEM bytes per pixel lane of the tile:
    #   double-buffered logits + double-buffered int32 targets (padded to 8 sublanes)
    #   + two full (C, tp) f32 accumulators + two (1, tp) f32 accumulators (8-sublane pad).
    bytes_per_lane = (2 * c_pad * in_item) + (2 * 8 * 4) + (2 * c_pad * 4) + (2 * 8 * 4)
    vmem_budget = 20 * 1024 * 1024
    tp_budget = max(128, ((vmem_budget // bytes_per_lane) // 128) * 128)
    tp_budget = min(tp_budget, 16 * 1024)           # diminishing returns past ~16K lanes
    tp_cap = _round_up(HW, 128)                     # never bigger than one (padded) image
    tp_req = tp_budget if tp is None else max(128, (tp // 128) * 128)
    tp_eff = min(tp_req, tp_cap)

    n_blk = pl.cdiv(HW, tp_eff)
    # Keep a parallel grid axis of size >= 2 so both v7x TensorCores stay busy at small N.
    P = 2 if n_blk >= 2 else 1
    n_blk_p = pl.cdiv(n_blk, P)
    need_mask = (P * n_blk_p * tp_eff) != HW        # ragged tail and/or padded split blocks

    kernel = functools.partial(_miou_kernel, hw=HW, tp=tp_eff,
                               n_blk_p=n_blk_p, need_mask=need_mask)

    def pix_map(n, p, j):
        # Clamp fully-out-of-range blocks (possible when P does not divide n_blk);
        # the in-kernel validity mask zeroes their contribution.
        return (n, 0, jnp.minimum(p * n_blk_p + j, n_blk - 1))

    vmem_limit = max(32 * 1024 * 1024,
                     _round_up(bytes_per_lane * tp_eff + (1 << 20), 1 << 20))

    cost = pl.CostEstimate(
        flops=12 * N * C * HW,
        transcendentals=N * HW * (C + 2),
        bytes_accessed=N * C * HW * in_item + N * HW * 4 + 2 * N * P * (C + 1) * 4,
    )

    inters_p, unions_p, loss_p, wsum_p = pl.pallas_call(
        kernel,
        out_shape=(
            jax.ShapeDtypeStruct((N, P, C, 1), jnp.float32),   # per-(image,split) intersection
            jax.ShapeDtypeStruct((N, P, C, 1), jnp.float32),   # per-(image,split) union
            jax.ShapeDtypeStruct((N, P, 1, 1), jnp.float32),   # per-(image,split) weighted NLL
            jax.ShapeDtypeStruct((N, P, 1, 1), jnp.float32),   # per-(image,split) weight sum
        ),
        grid_spec=pltpu.PrefetchScalarGridSpec(
            num_scalar_prefetch=0,
            grid=(N, P, n_blk_p),
            in_specs=[
                pl.BlockSpec((pl.Squeezed(), C, tp_eff), pix_map),   # logits
                pl.BlockSpec((pl.Squeezed(), 1, tp_eff), pix_map),   # targets
                pl.BlockSpec((C, 1), lambda n, p, j: (0, 0)),        # weights (resident)
            ],
            out_specs=(
                pl.BlockSpec((pl.Squeezed(), pl.Squeezed(), C, 1), lambda n, p, j: (n, p, 0, 0)),
                pl.BlockSpec((pl.Squeezed(), pl.Squeezed(), C, 1), lambda n, p, j: (n, p, 0, 0)),
                pl.BlockSpec((pl.Squeezed(), pl.Squeezed(), 1, 1), lambda n, p, j: (n, p, 0, 0)),
                pl.BlockSpec((pl.Squeezed(), pl.Squeezed(), 1, 1), lambda n, p, j: (n, p, 0, 0)),
            ),
            scratch_shapes=[
                pltpu.VMEM((C, tp_eff), jnp.float32),   # intersection accumulator
                pltpu.VMEM((C, tp_eff), jnp.float32),   # union accumulator
                pltpu.VMEM((1, tp_eff), jnp.float32),   # weighted log-prob accumulator
                pltpu.VMEM((1, tp_eff), jnp.float32),   # picked-weight accumulator
            ],
        ),
        compiler_params=pltpu.CompilerParams(
            dimension_semantics=("parallel", "parallel", "arbitrary"),
            vmem_limit_bytes=vmem_limit),
        cost_estimate=cost,
    )(x, t, w)

    # tiny final combine on per-(image, split) partials (negligible work, done in JAX)
    inters = jnp.sum(inters_p[..., 0], axis=1)      # (N, C)
    unions = jnp.sum(unions_p[..., 0], axis=1)      # (N, C)
    miou = 1.0 - jnp.mean(inters / unions)
    nll = jnp.sum(loss_p) / jnp.sum(wsum_p)
    return jnp.maximum(miou, nll)


def _reference(inputs, targets, class_weight):
    """Pure-JAX reference matching the PyTorch mIoULoss2d forward."""
    N, C, H, W = inputs.shape
    softs = jax.nn.softmax(inputs, axis=1)
    masks = jax.nn.one_hot(targets, C, axis=1, dtype=jnp.float32)
    inters = softs * masks
    unions = softs + masks - inters
    i_s = inters.reshape(N, C, -1).sum(-1)
    u_s = unions.reshape(N, C, -1).sum(-1)
    miou = 1.0 - jnp.mean(i_s / u_s)
    logp = jax.nn.log_softmax(inputs, axis=1)
    picked = jnp.take_along_axis(logp, targets[:, None, :, :], axis=1)[:, 0]
    wt = class_weight[targets]
    nll = -(wt * picked).sum() / wt.sum()
    return jnp.maximum(miou, nll)


if __name__ == "__main__":
    key = jax.random.PRNGKey(0)
    k_in, k_tgt, k_w = jax.random.split(key, 3)

    N, C = 2, 4
    class_weight = 0.5 + jax.random.uniform(k_w, (C,), dtype=jnp.float32)

    # Case 1: lane-aligned spatial size, auto-budgeted tile (single pixel block per image).
    H = W = 16
    inputs = jax.random.normal(k_in, (N, C, H, W), dtype=jnp.float32)
    targets = jax.random.randint(k_tgt, (N, H, W), 0, C, dtype=jnp.int32)
    loss = jax.block_until_ready(miou_loss_2d(inputs, targets, class_weight))
    ref = _reference(inputs, targets, class_weight)
    assert jnp.allclose(loss, ref, atol=1e-4, rtol=1e-4), (loss, ref)

    # Case 2: ragged spatial size (H*W = 576, not a multiple of 128) with a small forced tile:
    # exercises the masked tail, the 2-way parallel pixel split (with a clamped padding block),
    # and cross-block accumulation.
    H = W = 24
    inputs = jax.random.normal(k_in, (N, C, H, W), dtype=jnp.float32)
    targets = jax.random.randint(k_tgt, (N, H, W), 0, C, dtype=jnp.int32)
    loss = jax.block_until_ready(miou_loss_2d(inputs, targets, class_weight, tp=128))
    ref = _reference(inputs, targets, class_weight)
    assert jnp.allclose(loss, ref, atol=1e-4, rtol=1e-4), (loss, ref)

    print("KERNEL_OK")
</pallas_src>

<mosaic_0001>
module attributes {stable_mosaic.version = 11 : i64} {
  func.func @_miou_kernel(%arg0: i32, %arg1: i32, %arg2: i32, %arg3: memref<1x4x256xf32, #tpu.memory_space<vmem>>, %arg4: memref<1x1x256xi32, #tpu.memory_space<vmem>>, %arg5: memref<4x1xf32, #tpu.memory_space<vmem>>, %arg6: memref<1x1x4x1xf32, #tpu.memory_space<vmem>>, %arg7: memref<1x1x4x1xf32, #tpu.memory_space<vmem>>, %arg8: memref<1x1x1x1xf32, #tpu.memory_space<vmem>>, %arg9: memref<1x1x1x1xf32, #tpu.memory_space<vmem>>, %arg10: memref<4x256xf32, #tpu.memory_space<vmem>>, %arg11: memref<4x256xf32, #tpu.memory_space<vmem>>, %arg12: memref<1x256xf32, #tpu.memory_space<vmem>>, %arg13: memref<1x256xf32, #tpu.memory_space<vmem>>) attributes {dimension_semantics = [#tpu.dimension_semantics<parallel>, #tpu.dimension_semantics<parallel>, #tpu.dimension_semantics<arbitrary>], iteration_bounds = array<i64: 2, 1, 1>, scalar_prefetch = 0 : i64, scratch_operands = 4 : i64, tpu.core_type = #tpu.core_type<tc>, window_params = [{transform_indices = @transform_0, window_bounds = array<i64: 1, 4, 256>}, {transform_indices = @transform_1, window_bounds = array<i64: 1, 1, 256>}, {pipeline_mode = #tpu.pipeline_mode<synchronous>, transform_indices = @transform_2, window_bounds = array<i64: 4, 1>}, {transform_indices = @transform_3, window_bounds = array<i64: 1, 1, 4, 1>}, {transform_indices = @transform_4, window_bounds = array<i64: 1, 1, 4, 1>}, {transform_indices = @transform_5, window_bounds = array<i64: 1, 1, 1, 1>}, {transform_indices = @transform_6, window_bounds = array<i64: 1, 1, 1, 1>}]} {
    %c0_i32 = arith.constant 0 : i32
    %0 = arith.cmpi eq, %arg2, %c0_i32 : i32
    %1 = arith.extui %0 : i1 to i32
    %c0_i32_0 = arith.constant 0 : i32
    %2 = arith.cmpi ne, %1, %c0_i32_0 : i32
    scf.if %2 {
      %cst_33 = arith.constant 0.000000e+00 : f32
      %58 = vector.broadcast %cst_33 : f32 to vector<4x256xf32>
      %c0_34 = arith.constant 0 : index
      %c0_35 = arith.constant 0 : index
      %59 = vector.load %arg10[%c0_34, %c0_35] : memref<4x256xf32, #tpu.memory_space<vmem>>, vector<4x256xf32>
      tpu.vector_store %arg10[%c0_34, %c0_35], %58 {strides = array<i32>} : memref<4x256xf32, #tpu.memory_space<vmem>>, vector<4x256xf32>,
      %cst_36 = arith.constant 0.000000e+00 : f32
      %60 = vector.broadcast %cst_36 : f32 to vector<4x256xf32>
      %c0_37 = arith.constant 0 : index
      %c0_38 = arith.constant 0 : index
      %61 = vector.load %arg11[%c0_37, %c0_38] : memref<4x256xf32, #tpu.memory_space<vmem>>, vector<4x256xf32>
      tpu.vector_store %arg11[%c0_37, %c0_38], %60 {strides = array<i32>} : memref<4x256xf32, #tpu.memory_space<vmem>>, vector<4x256xf32>,
      %cst_39 = arith.constant 0.000000e+00 : f32
      %62 = vector.broadcast %cst_39 : f32 to vector<1x256xf32>
      %c0_40 = arith.constant 0 : index
      %c0_41 = arith.constant 0 : index
      %63 = vector.load %arg12[%c0_40, %c0_41] : memref<1x256xf32, #tpu.memory_space<vmem>>, vector<1x256xf32>
      tpu.vector_store %arg12[%c0_40, %c0_41], %62 {strides = array<i32>} : memref<1x256xf32, #tpu.memory_space<vmem>>, vector<1x256xf32>,
      %cst_42 = arith.constant 0.000000e+00 : f32
      %64 = vector.broadcast %cst_42 : f32 to vector<1x256xf32>
      %c0_43 = arith.constant 0 : index
      %c0_44 = arith.constant 0 : index
      %65 = vector.load %arg13[%c0_43, %c0_44] : memref<1x256xf32, #tpu.memory_space<vmem>>, vector<1x256xf32>
      tpu.vector_store %arg13[%c0_43, %c0_44], %64 {strides = array<i32>} : memref<1x256xf32, #tpu.memory_space<vmem>>, vector<1x256xf32>,
    } else {
    }
    %c0 = arith.constant 0 : index
    %c0_1 = arith.constant 0 : index
    %c0_2 = arith.constant 0 : index
    %3 = vector.load %arg3[%c0, %c0_1, %c0_2] : memref<1x4x256xf32, #tpu.memory_space<vmem>>, vector<1x4x256xf32>
    %4 = vector.shape_cast %3 : vector<1x4x256xf32> to vector<4x256xf32>
    %c0_3 = arith.constant 0 : index
    %c0_4 = arith.constant 0 : index
    %c0_5 = arith.constant 0 : index
    %5 = vector.load %arg4[%c0_3, %c0_4, %c0_5] : memref<1x1x256xi32, #tpu.memory_space<vmem>>, vector<1x1x256xi32>
    %6 = vector.shape_cast %5 : vector<1x1x256xi32> to vector<1x256xi32>
    %c0_6 = arith.constant 0 : index
    %c0_7 = arith.constant 0 : index
    %7 = vector.load %arg5[%c0_6, %c0_7] : memref<4x1xf32, #tpu.memory_space<vmem>>, vector<4x1xf32>
    %cst = arith.constant dense<0xFF800000> : vector<256xf32>
    %8 = vector.multi_reduction <maximumf>, %4, %cst [0] : vector<4x256xf32> to vector<256xf32>
    %9 = vector.shape_cast %8 : vector<256xf32> to vector<1x256xf32>
    %10 = vector.broadcast %9 : vector<1x256xf32> to vector<4x256xf32>
    %11 = arith.subf %4, %10 : vector<4x256xf32>
    %12 = math.exp %11 : vector<4x256xf32>
    %cst_8 = arith.constant dense<0.000000e+00> : vector<256xf32>
    %13 = vector.multi_reduction <add>, %12, %cst_8 [0] : vector<4x256xf32> to vector<256xf32>
    %14 = vector.shape_cast %13 : vector<256xf32> to vector<1x256xf32>
    %15 = tpu.reciprocal %14 {approx = true} : vector<1x256xf32> -> vector<1x256xf32>
    %16 = arith.mulf %14, %15 : vector<1x256xf32>
    %cst_9 = arith.constant 2.000000e+00 : f32
    %17 = vector.broadcast %cst_9 : f32 to vector<1x256xf32>
    %18 = arith.subf %17, %16 : vector<1x256xf32>
    %19 = arith.mulf %15, %18 : vector<1x256xf32>
    %20 = vector.broadcast %19 : vector<1x256xf32> to vector<4x256xf32>
    %21 = arith.mulf %12, %20 : vector<4x256xf32>
    %22 = vector.broadcast %9 : vector<1x256xf32> to vector<4x256xf32>
    %23 = arith.subf %4, %22 : vector<4x256xf32>
    %24 = math.log %14 : vector<1x256xf32>
    %25 = vector.broadcast %24 : vector<1x256xf32> to vector<4x256xf32>
    %26 = arith.subf %23, %25 : vector<4x256xf32>
    %27 = tpu.iota {dimensions = array<i32: 0>} : vector<4x256xi32>
    %28 = vector.broadcast %6 : vector<1x256xi32> to vector<4x256xi32>
    %29 = arith.cmpi eq, %27, %28 : vector<4x256xi32>
    %c0_10 = arith.constant 0 : index
    %c0_11 = arith.constant 0 : index
    %30 = vector.load %arg10[%c0_10, %c0_11] : memref<4x256xf32, #tpu.memory_space<vmem>>, vector<4x256xf32>
    %cst_12 = arith.constant 0.000000e+00 : f32
    %31 = vector.broadcast %cst_12 : f32 to vector<4x256xf32>
    %32 = arith.select %29, %21, %31 : vector<4x256xi1>, vector<4x256xf32>
    %33 = arith.addf %30, %32 : vector<4x256xf32>
    %c0_13 = arith.constant 0 : index
    %c0_14 = arith.constant 0 : index
    %34 = vector.load %arg10[%c0_13, %c0_14] : memref<4x256xf32, #tpu.memory_space<vmem>>, vector<4x256xf32>
    tpu.vector_store %arg10[%c0_13, %c0_14], %33 {strides = array<i32>} : memref<4x256xf32, #tpu.memory_space<vmem>>, vector<4x256xf32>,
    %c0_15 = arith.constant 0 : index
    %c0_16 = arith.constant 0 : index
    %35 = vector.load %arg11[%c0_15, %c0_16] : memref<4x256xf32, #tpu.memory_space<vmem>>, vector<4x256xf32>
    %cst_17 = arith.constant 1.000000e+00 : f32
    %36 = vector.broadcast %cst_17 : f32 to vector<4x256xf32>
    %37 = arith.select %29, %36, %21 : vector<4x256xi1>, vector<4x256xf32>
    %38 = arith.addf %35, %37 : vector<4x256xf32>
    %c0_18 = arith.constant 0 : index
    %c0_19 = arith.constant 0 : index
    %39 = vector.load %arg11[%c0_18, %c0_19] : memref<4x256xf32, #tpu.memory_space<vmem>>, vector<4x256xf32>
    tpu.vector_store %arg11[%c0_18, %c0_19], %38 {strides = array<i32>} : memref<4x256xf32, #tpu.memory_space<vmem>>, vector<4x256xf32>,
    %cst_20 = arith.constant 0.000000e+00 : f32
    %40 = vector.shape_cast %7 : vector<4x1xf32> to vector<4x1xf32>
    %41 = vector.broadcast %40 : vector<4x1xf32> to vector<4x256xf32>
    %42 = vector.broadcast %cst_20 : f32 to vector<4x256xf32>
    %43 = arith.select %29, %41, %42 : vector<4x256xi1>, vector<4x256xf32>
    %c0_21 = arith.constant 0 : index
    %c0_22 = arith.constant 0 : index
    %44 = vector.load %arg12[%c0_21, %c0_22] : memref<1x256xf32, #tpu.memory_space<vmem>>, vector<1x256xf32>
    %45 = arith.mulf %43, %26 : vector<4x256xf32>
    %cst_23 = arith.constant dense<0.000000e+00> : vector<256xf32>
    %46 = vector.multi_reduction <add>, %45, %cst_23 [0] : vector<4x256xf32> to vector<256xf32>
    %47 = vector.shape_cast %46 : vector<256xf32> to vector<1x256xf32>
    %48 = arith.addf %44, %47 : vector<1x256xf32>
    %c0_24 = arith.constant 0 : index
    %c0_25 = arith.constant 0 : index
    %49 = vector.load %arg12[%c0_24, %c0_25] : memref<1x256xf32, #tpu.memory_space<vmem>>, vector<1x256xf32>
    tpu.vector_store %arg12[%c0_24, %c0_25], %48 {strides = array<i32>} : memref<1x256xf32, #tpu.memory_space<vmem>>, vector<1x256xf32>,
    %c0_26 = arith.constant 0 : index
    %c0_27 = arith.constant 0 : index
    %50 = vector.load %arg13[%c0_26, %c0_27] : memref<1x256xf32, #tpu.memory_space<vmem>>, vector<1x256xf32>
    %cst_28 = arith.constant dense<0.000000e+00> : vector<256xf32>
    %51 = vector.multi_reduction <add>, %43, %cst_28 [0] : vector<4x256xf32> to vector<256xf32>
    %52 = vector.shape_cast %51 : vector<256xf32> to vector<1x256xf32>
    %53 = arith.addf %50, %52 : vector<1x256xf32>
    %c0_29 = arith.constant 0 : index
    %c0_30 = arith.constant 0 : index
    %54 = vector.load %arg13[%c0_29, %c0_30] : memref<1x256xf32, #tpu.memory_space<vmem>>, vector<1x256xf32>
    tpu.vector_store %arg13[%c0_29, %c0_30], %53 {strides = array<i32>} : memref<1x256xf32, #tpu.memory_space<vmem>>, vector<1x256xf32>,
    %c0_i32_31 = arith.constant 0 : i32
    %55 = arith.cmpi eq, %arg2, %c0_i32_31 : i32
    %56 = arith.extui %55 : i1 to i32
    %c0_i32_32 = arith.constant 0 : i32
    %57 = arith.cmpi ne, %56, %c0_i32_32 : i32
    scf.if %57 {
      %c0_33 = arith.constant 0 : index
      %c0_34 = arith.constant 0 : index
      %58 = vector.load %arg10[%c0_33, %c0_34] : memref<4x256xf32, #tpu.memory_space<vmem>>, vector<4x256xf32>
      %cst_35 = arith.constant dense<0.000000e+00> : vector<4xf32>
      %59 = vector.multi_reduction <add>, %58, %cst_35 [1] : vector<4x256xf32> to vector<4xf32>
      %60 = vector.shape_cast %59 : vector<4xf32> to vector<4x1xf32>
      %c0_36 = arith.constant 0 : index
      %c0_37 = arith.constant 0 : index
      %c0_38 = arith.constant 0 : index
      %c0_39 = arith.constant 0 : index
      %61 = vector.load %arg6[%c0_36, %c0_37, %c0_38, %c0_39] : memref<1x1x4x1xf32, #tpu.memory_space<vmem>>, vector<1x1x4x1xf32>
      %62 = vector.shape_cast %61 : vector<1x1x4x1xf32> to vector<4x1xf32>
      %63 = vector.shape_cast %60 : vector<4x1xf32> to vector<1x1x4x1xf32>
      tpu.vector_store %arg6[%c0_36, %c0_37, %c0_38, %c0_39], %63 {strides = array<i32>} : memref<1x1x4x1xf32, #tpu.memory_space<vmem>>, vector<1x1x4x1xf32>,
      %c0_40 = arith.constant 0 : index
      %c0_41 = arith.constant 0 : index
      %64 = vector.load %arg11[%c0_40, %c0_41] : memref<4x256xf32, #tpu.memory_space<vmem>>, vector<4x256xf32>
      %cst_42 = arith.constant dense<0.000000e+00> : vector<4xf32>
      %65 = vector.multi_reduction <add>, %64, %cst_42 [1] : vector<4x256xf32> to vector<4xf32>
      %66 = vector.shape_cast %65 : vector<4xf32> to vector<4x1xf32>
      %c0_43 = arith.constant 0 : index
      %c0_44 = arith.constant 0 : index
      %c0_45 = arith.constant 0 : index
      %c0_46 = arith.constant 0 : index
      %67 = vector.load %arg7[%c0_43, %c0_44, %c0_45, %c0_46] : memref<1x1x4x1xf32, #tpu.memory_space<vmem>>, vector<1x1x4x1xf32>
      %68 = vector.shape_cast %67 : vector<1x1x4x1xf32> to vector<4x1xf32>
      %69 = vector.shape_cast %66 : vector<4x1xf32> to vector<1x1x4x1xf32>
      tpu.vector_store %arg7[%c0_43, %c0_44, %c0_45, %c0_46], %69 {strides = array<i32>} : memref<1x1x4x1xf32, #tpu.memory_space<vmem>>, vector<1x1x4x1xf32>,
      %c0_47 = arith.constant 0 : index
      %c0_48 = arith.constant 0 : index
      %70 = vector.load %arg12[%c0_47, %c0_48] : memref<1x256xf32, #tpu.memory_space<vmem>>, vector<1x256xf32>
      %71 = vector.shape_cast %70 : vector<1x256xf32> to vector<1x1x256xf32>
      %cst_49 = arith.constant dense<0.000000e+00> : vector<1xf32>
      %72 = vector.multi_reduction <add>, %71, %cst_49 [1, 2] : vector<1x1x256xf32> to vector<1xf32>
      %73 = vector.shape_cast %72 : vector<1xf32> to vector<1x1x1xf32>
      %74 = vector.extract %73[0, 0, 0] : f32 from vector<1x1x1xf32>
      %cst_50 = arith.constant 0.000000e+00 : f32
      %75 = arith.subf %cst_50, %74 : f32
      %76 = vector.broadcast %75 : f32 to vector<1x1xf32>
      %c0_51 = arith.constant 0 : index
      %c0_52 = arith.constant 0 : index
      %c0_53 = arith.constant 0 : index
      %c0_54 = arith.constant 0 : index
      %77 = vector.load %arg8[%c0_51, %c0_52, %c0_53, %c0_54] : memref<1x1x1x1xf32, #tpu.memory_space<vmem>>, vector<1x1x1x1xf32>
      %78 = vector.shape_cast %77 : vector<1x1x1x1xf32> to vector<1x1xf32>
      %79 = vector.shape_cast %76 : vector<1x1xf32> to vector<1x1x1x1xf32>
      tpu.vector_store %arg8[%c0_51, %c0_52, %c0_53, %c0_54], %79 {strides = array<i32>} : memref<1x1x1x1xf32, #tpu.memory_space<vmem>>, vector<1x1x1x1xf32>,
      %c0_55 = arith.constant 0 : index
      %c0_56 = arith.constant 0 : index
      %80 = vector.load %arg13[%c0_55, %c0_56] : memref<1x256xf32, #tpu.memory_space<vmem>>, vector<1x256xf32>
      %81 = vector.shape_cast %80 : vector<1x256xf32> to vector<1x1x256xf32>
      %cst_57 = arith.constant dense<0.000000e+00> : vector<1xf32>
      %82 = vector.multi_reduction <add>, %81, %cst_57 [1, 2] : vector<1x1x256xf32> to vector<1xf32>
      %83 = vector.shape_cast %82 : vector<1xf32> to vector<1x1x1xf32>
      %84 = vector.extract %83[0, 0, 0] : f32 from vector<1x1x1xf32>
      %85 = vector.broadcast %84 : f32 to vector<1x1xf32>
      %c0_58 = arith.constant 0 : index
      %c0_59 = arith.constant 0 : index
      %c0_60 = arith.constant 0 : index
      %c0_61 = arith.constant 0 : index
      %86 = vector.load %arg9[%c0_58, %c0_59, %c0_60, %c0_61] : memref<1x1x1x1xf32, #tpu.memory_space<vmem>>, vector<1x1x1x1xf32>
      %87 = vector.shape_cast %86 : vector<1x1x1x1xf32> to vector<1x1xf32>
      %88 = vector.shape_cast %85 : vector<1x1xf32> to vector<1x1x1x1xf32>
      tpu.vector_store %arg9[%c0_58, %c0_59, %c0_60, %c0_61], %88 {strides = array<i32>} : memref<1x1x1x1xf32, #tpu.memory_space<vmem>>, vector<1x1x1x1xf32>,
    } else {
    }
    return
  }
  func.func @transform_0(%arg0: i32, %arg1: i32, %arg2: i32) -> (i32, i32, i32) {
    %c1_i32 = arith.constant 1 : i32
    %0 = arith.muli %arg1, %c1_i32 : i32
    %1 = arith.addi %0, %arg2 : i32
    %c0_i32 = arith.constant 0 : i32
    %2 = arith.minsi %1, %c0_i32 : i32
    %c0_i32_0 = arith.constant 0 : i32
    %c0_i32_1 = arith.constant 0 : i32
    return %arg0, %c0_i32_0, %2 : i32, i32, i32
  }
  func.func @transform_1(%arg0: i32, %arg1: i32, %arg2: i32) -> (i32, i32, i32) {
    %c1_i32 = arith.constant 1 : i32
    %0 = arith.muli %arg1, %c1_i32 : i32
    %1 = arith.addi %0, %arg2 : i32
    %c0_i32 = arith.constant 0 : i32
    %2 = arith.minsi %1, %c0_i32 : i32
    %c0_i32_0 = arith.constant 0 : i32
    %c0_i32_1 = arith.constant 0 : i32
    return %arg0, %c0_i32_0, %2 : i32, i32, i32
  }
  func.func @transform_2(%arg0: i32, %arg1: i32, %arg2: i32) -> (i32, i32) {
    %c0_i32 = arith.constant 0 : i32
    %c0_i32_0 = arith.constant 0 : i32
    %c0_i32_1 = arith.constant 0 : i32
    return %c0_i32, %c0_i32_0 : i32, i32
  }
  func.func @transform_3(%arg0: i32, %arg1: i32, %arg2: i32) -> (i32, i32, i32, i32) {
    %c0_i32 = arith.constant 0 : i32
    %c0_i32_0 = arith.constant 0 : i32
    %c0_i32_1 = arith.constant 0 : i32
    return %arg0, %arg1, %c0_i32, %c0_i32_0 : i32, i32, i32, i32
  }
  func.func @transform_4(%arg0: i32, %arg1: i32, %arg2: i32) -> (i32, i32, i32, i32) {
    %c0_i32 = arith.constant 0 : i32
    %c0_i32_0 = arith.constant 0 : i32
    %c0_i32_1 = arith.constant 0 : i32
    return %arg0, %arg1, %c0_i32, %c0_i32_0 : i32, i32, i32, i32
  }
  func.func @transform_5(%arg0: i32, %arg1: i32, %arg2: i32) -> (i32, i32, i32, i32) {
    %c0_i32 = arith.constant 0 : i32
    %c0_i32_0 = arith.constant 0 : i32
    %c0_i32_1 = arith.constant 0 : i32
    return %arg0, %arg1, %c0_i32, %c0_i32_0 : i32, i32, i32, i32
  }
  func.func @transform_6(%arg0: i32, %arg1: i32, %arg2: i32) -> (i32, i32, i32, i32) {
    %c0_i32 = arith.constant 0 : i32
    %c0_i32_0 = arith.constant 0 : i32
    %c0_i32_1 = arith.constant 0 : i32
    return %arg0, %arg1, %c0_i32, %c0_i32_0 : i32, i32, i32, i32
  }
}

</mosaic_0001>

<llo_original>
// kernel: miou_loss_2d.1
$region0: #{miou_loss_2d.1}
  #allocation0 [shape = 'u32[]', space=smem, size = 0x4, offset = 0x4, fixed_abs, tag = 'smem constant byte address 0x4 - core index']
  #allocation1 [shape = 'u32[72,128]{1,0:T(1,128)}', space=vmem, size = 0x9000, scoped, tag = 'internal scratch']
  #allocation2 [shape = 'f32[4,256]{1,0:T(4,128)}', space=vmem, size = 0x1000, scoped, tag = 'scratch operand']
  #allocation3 [shape = 'f32[4,256]{1,0:T(4,128)}', space=vmem, size = 0x1000, scoped, tag = 'scratch operand']
  #allocation4 [shape = 'f32[1,256]{1,0:T(1,128)}', space=vmem, size = 0x400, scoped, tag = 'scratch operand']
  #allocation5 [shape = 'f32[1,256]{1,0:T(1,128)}', space=vmem, size = 0x400, scoped, tag = 'scratch operand']
  %s0 = inlined_call_operand.vmem [shape: f32[2,4,256], index: 0, kind: input, shape index: {}]
  %s1 = inlined_call_operand.vmem [shape: s32[2,1,256], index: 1, kind: input, shape index: {}]
  %s2 = inlined_call_operand.vmem [shape: f32[4,1], index: 2, kind: input, shape index: {}]
  %s3 = inlined_call_operand.vmem [shape: f32[2,1,4,1], index: 3, kind: output, shape index: {0}]
  %s4 = inlined_call_operand.vmem [shape: f32[2,1,4,1], index: 4, kind: output, shape index: {1}]
  %s5 = inlined_call_operand.vmem [shape: f32[2,1,1,1], index: 5, kind: output, shape index: {2}]
  %s6 = inlined_call_operand.vmem [shape: f32[2,1,1,1], index: 6, kind: output, shape index: {3}]
  %7 = xla_tuple %s3, %s4, %s5, %s6
  %s8 = sld [smem:[#allocation0]]
  $region77: #{miou_loss_2d.1} parent=0
    _
  %s10 = ssub.s32 1, %s8
  %s11 = scalar_select 0, %s10, %s8
  loop: start=0, step=1, limit=4
  $region2: #{miou_loss_2d.1} parent=0 // loop_pre_header
    _
  $region3: #{miou_loss_2d.1} parent=0 // loop_header
    %s13 = sphi 0, %s17
    %p14 = scmp.ge.s32.totalorder %s13, 4
    %s20 = sphi 0, %s39
    %s21 = sphi 0, %s35
    %s22 = sphi 0, %s31
    %s23 = sphi 0, %s20
    %s24 = sphi 0, %s21
    %s25 = sphi 0, %s22
    %s26 = sphi 0, %s23
    %s27 = sphi 0, %s24
    %s28 = sphi 0, %s25
    %s50 = sphi 0, %s52
    %s53 = sphi 0, %s50
    %s54 = sphi 0, %s53
    %s70 = sphi 0, %s54
    %s84 = sphi 0, %s86
    %s87 = sphi 0, %s84
    %s88 = sphi 0, %s87
    %s104 = sphi 0, %s88
    %s108 = sphi 0, %s108
    %s110 = sphi 0, %s108
    %s111 = sphi 0, %s110
    %s125 = sphi 0, %s111
    %s133 = sphi 0, %s135
    %s136 = sphi 0, %s133
    %s137 = sphi 0, %s136
    %s153 = sphi 0, %s137
    %s161 = sphi 0, %s163
    %s164 = sphi 0, %s161
    %s165 = sphi 0, %s164
    %s181 = sphi 0, %s165
    %s189 = sphi 0, %s191
    %s192 = sphi 0, %s189
    %s193 = sphi 0, %s192
    %s209 = sphi 0, %s193
    %s217 = sphi 0, %s219
    %s220 = sphi 0, %s217
    %s221 = sphi 0, %s220
    %s237 = sphi 0, %s221
  $region4: #{miou_loss_2d.1} parent=0 // loop_header_branch
    %16 = sbr.rel (%p14) target = $region8
  $region5: #{miou_loss_2d.1} parent=0 // loop_body
    %s18 = ssub.s32 %s13, 1
    %s19 = ssub.s32 %s13, 2
    %s29 = sadd.s32 1, %s22
    %p30 = scmp.ge.s32.totalorder %s29, 1
    %s31 = scalar_select %p30, 0, %s29
    %s32 = sadd.s32 1, %s21
    %s33 = scalar_select %p30, %s32, %s21
    %p34 = scmp.ge.s32.totalorder %s33, 1
    %s35 = scalar_select %p34, 0, %s33
    %s36 = sadd.s32 1, %s20
    %s37 = scalar_select %p34, %s36, %s20
    %p38 = scmp.ge.s32.totalorder %s37, 2
    %s39 = scalar_select %p38, 0, %s37
    %s40 = sadd.s32 %s21, %s22
    %p41 = scmp.lt.s32.totalorder %s40, 0
    %s42 = scalar_select %p41, %s40, 0
    %s43 = sadd.s32 %s35, %s31
    %p44 = scmp.lt.s32.totalorder %s43, 0
    %s45 = scalar_select %p44, %s43, 0
    %s46 = ssub.s32 %s20, %s39
    %s47 = ssub.s32 %s42, %s45
    %s48 = sor.u32 %s46, %s47
    %p49 = scmp.eq.s32.totalorder %s48, 0
    %s51 = sadd.s32 %s50, 1
    %s52 = scalar_select %p49, %s50, %s51
    %p55 = pneg %p49
    %p56 = scmp.eq.s32.totalorder %s13, 1
    %p57 = por %p55, %p56
    %p58 = scmp.ne.s32.totalorder %s50, %s53
    %p59 = scmp.eq.s32.totalorder %s13, 0
    %p60 = por %p58, %p59
    %p61 = scmp.ne.s32.totalorder %s50, %s53
    %p62 = scmp.eq.s32.totalorder %s18, 1
    %p63 = por %p61, %p62
    %p64 = scmp.ne.s32.totalorder %s53, %s54
    %p65 = scmp.eq.s32.totalorder %s18, 0
    %p66 = por %p64, %p65
    %p67 = scmp.ne.s32.totalorder %s53, %s54
    %p68 = scmp.eq.s32.totalorder %s19, 1
    %p69 = por %p67, %p68
    %p71 = scmp.ne.s32.totalorder %s54, %s70
    %p72 = scmp.eq.s32.totalorder %s19, 0
    %p73 = por %p71, %p72
    %s74 = sadd.s32 %s21, %s22
    %p75 = scmp.lt.s32.totalorder %s74, 0
    %s76 = scalar_select %p75, %s74, 0
    %s77 = sadd.s32 %s35, %s31
    %p78 = scmp.lt.s32.totalorder %s77, 0
    %s79 = scalar_select %p78, %s77, 0
    %s80 = ssub.s32 %s20, %s39
    %s81 = ssub.s32 %s76, %s79
    %s82 = sor.u32 %s80, %s81
    %p83 = scmp.eq.s32.totalorder %s82, 0
    %s85 = sadd.s32 %s84, 1
    %s86 = scalar_select %p83, %s84, %s85
    %p89 = pneg %p83
    %p90 = scmp.eq.s32.totalorder %s13, 1
    %p91 = por %p89, %p90
    %p92 = scmp.ne.s32.totalorder %s84, %s87
    %p93 = scmp.eq.s32.totalorder %s13, 0
    %p94 = por %p92, %p93
    %p95 = scmp.ne.s32.totalorder %s84, %s87
    %p96 = scmp.eq.s32.totalorder %s18, 1
    %p97 = por %p95, %p96
    %p98 = scmp.ne.s32.totalorder %s87, %s88
    %p99 = scmp.eq.s32.totalorder %s18, 0
    %p100 = por %p98, %p99
    %p101 = scmp.ne.s32.totalorder %s87, %s88
    %p102 = scmp.eq.s32.totalorder %s19, 1
    %p103 = por %p101, %p102
    %p105 = scmp.ne.s32.totalorder %s88, %s104
    %p106 = scmp.eq.s32.totalorder %s19, 0
    %p107 = por %p105, %p106
    %s109 = sadd.s32 %s108, 1
    %p112 = scmp.eq.s32.totalorder %s13, 1
    %p113 = scmp.ne.s32.totalorder %s108, %s110
    %p114 = scmp.eq.s32.totalorder %s13, 0
    %p115 = por %p113, %p114
    %p116 = scmp.ne.s32.totalorder %s108, %s110
    %p117 = scmp.eq.s32.totalorder %s18, 1
    %p118 = por %p116, %p117
    %p119 = scmp.ne.s32.totalorder %s110, %s111
    %p120 = scmp.eq.s32.totalorder %s18, 0
    %p121 = por %p119, %p120
    %p122 = scmp.ne.s32.totalorder %s110, %s111
    %p123 = scmp.eq.s32.totalorder %s19, 1
    %p124 = por %p122, %p123
    %p126 = scmp.ne.s32.totalorder %s111, %s125
    %p127 = scmp.eq.s32.totalorder %s19, 0
    %p128 = por %p126, %p127
    %s129 = ssub.s32 %s20, %s39
    %s130 = ssub.s32 %s21, %s35
    %s131 = sor.u32 %s129, %s130
    %p132 = scmp.eq.s32.totalorder %s131, 0
    %s134 = sadd.s32 %s133, 1
    %s135 = scalar_select %p132, %s133, %s134
    %p138 = pneg %p132
    %p139 = scmp.eq.s32.totalorder %s13, 1
    %p140 = por %p138, %p139
    %p141 = scmp.ne.s32.totalorder %s133, %s136
    %p142 = scmp.eq.s32.totalorder %s13, 0
    %p143 = por %p141, %p142
    %p144 = scmp.ne.s32.totalorder %s133, %s136
    %p145 = scmp.eq.s32.totalorder %s18, 1
    %p146 = por %p144, %p145
    %p147 = scmp.ne.s32.totalorder %s136, %s137
    %p148 = scmp.eq.s32.totalorder %s18, 0
    %p149 = por %p147, %p148
    %p150 = scmp.ne.s32.totalorder %s136, %s137
    %p151 = scmp.eq.s32.totalorder %s19, 1
    %p152 = por %p150, %p151
    %p154 = scmp.ne.s32.totalorder %s137, %s153
    %p155 = scmp.eq.s32.totalorder %s19, 0
    %p156 = por %p154, %p155
    %s157 = ssub.s32 %s20, %s39
    %s158 = ssub.s32 %s21, %s35
    %s159 = sor.u32 %s157, %s158
    %p160 = scmp.eq.s32.totalorder %s159, 0
    %s162 = sadd.s32 %s161, 1
    %s163 = scalar_select %p160, %s161, %s162
    %p166 = pneg %p160
    %p167 = scmp.eq.s32.totalorder %s13, 1
    %p168 = por %p166, %p167
    %p169 = scmp.ne.s32.totalorder %s161, %s164
    %p170 = scmp.eq.s32.totalorder %s13, 0
    %p171 = por %p169, %p170
    %p172 = scmp.ne.s32.totalorder %s161, %s164
    %p173 = scmp.eq.s32.totalorder %s18, 1
    %p174 = por %p172, %p173
    %p175 = scmp.ne.s32.totalorder %s164, %s165
    %p176 = scmp.eq.s32.totalorder %s18, 0
    %p177 = por %p175, %p176
    %p178 = scmp.ne.s32.totalorder %s164, %s165
    %p179 = scmp.eq.s32.totalorder %s19, 1
    %p180 = por %p178, %p179
    %p182 = scmp.ne.s32.totalorder %s165, %s181
    %p183 = scmp.eq.s32.totalorder %s19, 0
    %p184 = por %p182, %p183
    %s185 = ssub.s32 %s20, %s39
    %s186 = ssub.s32 %s21, %s35
    %s187 = sor.u32 %s185, %s186
    %p188 = scmp.eq.s32.totalorder %s187, 0
    %s190 = sadd.s32 %s189, 1
    %s191 = scalar_select %p188, %s189, %s190
    %p194 = pneg %p188
    %p195 = scmp.eq.s32.totalorder %s13, 1
    %p196 = por %p194, %p195
    %p197 = scmp.ne.s32.totalorder %s189, %s192
    %p198 = scmp.eq.s32.totalorder %s13, 0
    %p199 = por %p197, %p198
    %p200 = scmp.ne.s32.totalorder %s189, %s192
    %p201 = scmp.eq.s32.totalorder %s18, 1
    %p202 = por %p200, %p201
    %p203 = scmp.ne.s32.totalorder %s192, %s193
    %p204 = scmp.eq.s32.totalorder %s18, 0
    %p205 = por %p203, %p204
    %p206 = scmp.ne.s32.totalorder %s192, %s193
    %p207 = scmp.eq.s32.totalorder %s19, 1
    %p208 = por %p206, %p207
    %p210 = scmp.ne.s32.totalorder %s193, %s209
    %p211 = scmp.eq.s32.totalorder %s19, 0
    %p212 = por %p210, %p211
    %s213 = ssub.s32 %s20, %s39
    %s214 = ssub.s32 %s21, %s35
    %s215 = sor.u32 %s213, %s214
    %p216 = scmp.eq.s32.totalorder %s215, 0
    %s218 = sadd.s32 %s217, 1
    %s219 = scalar_select %p216, %s217, %s218
    %p222 = pneg %p216
    %p223 = scmp.eq.s32.totalorder %s13, 1
    %p224 = por %p222, %p223
    %p225 = scmp.ne.s32.totalorder %s217, %s220
    %p226 = scmp.eq.s32.totalorder %s13, 0
    %p227 = por %p225, %p226
    %p228 = scmp.ne.s32.totalorder %s217, %s220
    %p229 = scmp.eq.s32.totalorder %s18, 1
    %p230 = por %p228, %p229
    %p231 = scmp.ne.s32.totalorder %s220, %s221
    %p232 = scmp.eq.s32.totalorder %s18, 0
    %p233 = por %p231, %p232
    %p234 = scmp.ne.s32.totalorder %s220, %s221
    %p235 = scmp.eq.s32.totalorder %s19, 1
    %p236 = por %p234, %p235
    %p238 = scmp.ne.s32.totalorder %s221, %s237
    %p239 = scmp.eq.s32.totalorder %s19, 0
    %p240 = por %p238, %p239
    %p241 = scmp.le.s32.totalorder 1, %s13
    %p242 = scmp.lt.s32.totalorder %s13, 3
    %p243 = pnand %p241, %p242
    %p244 = pneg %p243
    // Predicated region
    $region9: #{miou_loss_2d.1} parent=5 // pred_check
      _
    $region10: #{miou_loss_2d.1} parent=5 // pred_check_branch
      %246 = sbr.rel (%p243) target = $region12
    $region11: #{miou_loss_2d.1} parent=5 // pred_region
      %s247 = ssub.s32 %s13, 1
      // Predicated region
      $region13: #{miou_loss_2d.1} parent=11 // pred_check
        %p248 = pneg %p121
      $region14: #{miou_loss_2d.1} parent=11 // pred_check_branch
        %250 = sbr.rel (%p248) target = $region16
      $region15: #{miou_loss_2d.1} parent=11 // pred_region
        _
      $region16: #{miou_loss_2d.1} parent=11 // pred_fallthru
        _
    $region12: #{miou_loss_2d.1} parent=5 // pred_fallthru
      _
    %p251 = scmp.lt.s32.totalorder %s13, 2
    // Predicated region
    $region17: #{miou_loss_2d.1} parent=5 // pred_check
      %p252 = pneg %p251
    $region18: #{miou_loss_2d.1} parent=5 // pred_check_branch
      %254 = sbr.rel (%p252) target = $region20
    $region19: #{miou_loss_2d.1} parent=5 // pred_region
      // Predicated region
      $region21: #{miou_loss_2d.1} parent=19 // pred_check
        %p255 = pneg %p60
      $region22: #{miou_loss_2d.1} parent=19 // pred_check_branch
        %257 = sbr.rel (%p255) target = $region24
      $region23: #{miou_loss_2d.1} parent=19 // pred_region
        %s258 = sadd.s32 %s21, %s22
        %p259 = scmp.lt.s32.totalorder %s258, 0
        %s260 = scalar_select %p259, %s258, 0
        %s261 = smul.u32 2, %s260
        %p262 = scmp.lt.s32.totalorder %s20, 1
        %s263 = scalar_select %p262, %s20, 1
        %p264 = scmp.lt.s32.totalorder %s261, 1
        %s265 = scalar_select %p264, %s261, 1
        %s266 = smul.addr %s263, 2
        %s267 = sadd.s32 %s265, %s266
        %s268 = smul.addr %s267, 4
        %s269 = scalar_lea.vmem %s0, %s268
        %s270 = sadd.s32 %s21, %s22
        %p271 = scmp.lt.s32.totalorder %s270, 0
        %s272 = scalar_select %p271, %s270, 0
        %s273 = smul.u32 2, %s272
      $region24: #{miou_loss_2d.1} parent=19 // pred_fallthru
        _
      // Predicated region
      $region25: #{miou_loss_2d.1} parent=19 // pred_check
        %p274 = pneg %p94
      $region26: #{miou_loss_2d.1} parent=19 // pred_check_branch
        %276 = sbr.rel (%p274) target = $region28
      $region27: #{miou_loss_2d.1} parent=19 // pred_region
        %s277 = sadd.s32 %s21, %s22
        %p278 = scmp.lt.s32.totalorder %s277, 0
        %s279 = scalar_select %p278, %s277, 0
        %s280 = smul.u32 2, %s279
        %p281 = scmp.lt.s32.totalorder %s20, 1
        %s282 = scalar_select %p281, %s20, 1
        %p283 = scmp.lt.s32.totalorder %s280, 1
        %s284 = scalar_select %p283, %s280, 1
        %s285 = smul.addr %s282, 2
        %s286 = sadd.s32 %s284, %s285
        %s287 = scalar_lea.vmem %s1, %s286
        %s288 = sadd.s32 %s21, %s22
        %p289 = scmp.lt.s32.totalorder %s288, 0
        %s290 = scalar_select %p289, %s288, 0
        %s291 = smul.u32 2, %s290
      $region28: #{miou_loss_2d.1} parent=19 // pred_fallthru
        _
    $region20: #{miou_loss_2d.1} parent=5 // pred_fallthru
      _
    %p292 = scmp.le.s32.totalorder 1, %s13
    %p293 = scmp.lt.s32.totalorder %s13, 3
    %p294 = pnand %p292, %p293
    %p295 = pneg %p294
    // Predicated region
    $region29: #{miou_loss_2d.1} parent=5 // pred_check
      _
    $region30: #{miou_loss_2d.1} parent=5 // pred_check_branch
      %297 = sbr.rel (%p294) target = $region32
    $region31: #{miou_loss_2d.1} parent=5 // pred_region
      %s298 = ssub.s32 %s13, 1
      %s299 = sadd.s32 %s24, %s25
      %p300 = scmp.lt.s32.totalorder %s299, 0
      %s301 = scalar_select %p300, %s299, 0
      %s302 = smul.u32 2, %s301
      %p303 = scmp.lt.s32.totalorder %s23, 1
      %s304 = scalar_select %p303, %s23, 1
      %p305 = scmp.lt.s32.totalorder %s302, 1
      %s306 = scalar_select %p305, %s302, 1
      %s307 = smul.addr %s304, 2
      %s308 = sadd.s32 %s306, %s307
      %s309 = smul.addr %s308, 4
      %s310 = scalar_lea.vmem %s0, %s309
      %p311 = pneg %p66
      %p312 = pneg %p63
      %s313 = sadd.s32 %s24, %s25
      %p314 = scmp.lt.s32.totalorder %s313, 0
      %s315 = scalar_select %p314, %s313, 0
      %s316 = smul.u32 2, %s315
      %p317 = scmp.lt.s32.totalorder %s23, 1
      %s318 = scalar_select %p317, %s23, 1
      %p319 = scmp.lt.s32.totalorder %s316, 1
      %s320 = scalar_select %p319, %s316, 1
      %s321 = smul.addr %s318, 2
      %s322 = sadd.s32 %s320, %s321
      %s323 = scalar_lea.vmem %s1, %s322
      %p324 = pneg %p100
      %p325 = pneg %p97
      %p326 = pneg %p121
      %p327 = pneg %p118
      %p328 = pneg %p149
      %p329 = pneg %p146
      %p330 = scmp.lt.s32.totalorder %s23, 1
      %s331 = scalar_select %p330, %s23, 1
      %p332 = scmp.lt.s32.totalorder %s24, 0
      %s333 = scalar_select %p332, %s24, 0
      %s334 = sadd.s32 %s333, %s331
      %s335 = smul.addr %s334, 4
      %s336 = scalar_lea.vmem %s3, %s335
      %p337 = pneg %p177
      %p338 = pneg %p174
      %p339 = scmp.lt.s32.totalorder %s23, 1
      %s340 = scalar_select %p339, %s23, 1
      %p341 = scmp.lt.s32.totalorder %s24, 0
      %s342 = scalar_select %p341, %s24, 0
      %s343 = sadd.s32 %s342, %s340
      %s344 = smul.addr %s343, 4
      %s345 = scalar_lea.vmem %s4, %s344
      %p346 = pneg %p205
      %p347 = pneg %p202
      %p348 = scmp.lt.s32.totalorder %s23, 1
      %s349 = scalar_select %p348, %s23, 1
      %p350 = scmp.lt.s32.totalorder %s24, 0
      %s351 = scalar_select %p350, %s24, 0
      %s352 = sadd.s32 %s351, %s349
      %s353 = scalar_lea.vmem %s5, %s352
      %p354 = pneg %p233
      %p355 = pneg %p230
      %p356 = scmp.lt.s32.totalorder %s23, 1
      %s357 = scalar_select %p356, %s23, 1
      %p358 = scmp.lt.s32.totalorder %s24, 0
      %s359 = scalar_select %p358, %s24, 0
      %s360 = sadd.s32 %s359, %s357
      %s361 = scalar_lea.vmem %s6, %s360
      %s362 = sadd.s32 %s24, %s25
      %p363 = scmp.lt.s32.totalorder %s362, 0
      %s364 = scalar_select %p363, %s362, 0
      %s365 = smul.u32 2, %s364
      %p366 = scmp.lt.s32.totalorder %s23, 1
      %s367 = scalar_select %p366, %s23, 1
      %p368 = scmp.lt.s32.totalorder %s365, 1
      %s369 = scalar_select %p368, %s365, 1
      %s370 = smul.addr %s367, 2
      %s371 = sadd.s32 %s369, %s370
      %s372 = smul.addr %s371, 4
      %s373 = scalar_lea.vmem %s0, %s372
      %s374 = sadd.s32 %s24, %s25
      %p375 = scmp.lt.s32.totalorder %s374, 0
      %s376 = scalar_select %p375, %s374, 0
      %s377 = smul.u32 2, %s376
      %s378 = sadd.s32 %s24, %s25
      %p379 = scmp.lt.s32.totalorder %s378, 0
      %s380 = scalar_select %p379, %s378, 0
      %s381 = smul.u32 2, %s380
      %p382 = scmp.lt.s32.totalorder %s23, 1
      %s383 = scalar_select %p382, %s23, 1
      %p384 = scmp.lt.s32.totalorder %s381, 1
      %s385 = scalar_select %p384, %s381, 1
      %s386 = smul.addr %s383, 2
      %s387 = sadd.s32 %s385, %s386
      %s388 = scalar_lea.vmem %s1, %s387
      %s389 = sadd.s32 %s24, %s25
      %p390 = scmp.lt.s32.totalorder %s389, 0
      %s391 = scalar_select %p390, %s389, 0
      %s392 = smul.u32 2, %s391
      %p393 = scmp.lt.s32.totalorder %s23, 1
      %s394 = scalar_select %p393, %s23, 1
      %p395 = scmp.lt.s32.totalorder %s24, 0
      %s396 = scalar_select %p395, %s24, 0
      %s397 = sadd.s32 %s396, %s394
      %s398 = smul.addr %s397, 4
      %s399 = scalar_lea.vmem %s3, %s398
      %p400 = scmp.lt.s32.totalorder %s23, 1
      %s401 = scalar_select %p400, %s23, 1
      %p402 = scmp.lt.s32.totalorder %s24, 0
      %s403 = scalar_select %p402, %s24, 0
      %s404 = sadd.s32 %s403, %s401
      %s405 = smul.addr %s404, 4
      %s406 = scalar_lea.vmem %s4, %s405
      %p407 = scmp.lt.s32.totalorder %s23, 1
      %s408 = scalar_select %p407, %s23, 1
      %p409 = scmp.lt.s32.totalorder %s24, 0
      %s410 = scalar_select %p409, %s24, 0
      %s411 = sadd.s32 %s410, %s408
      %s412 = scalar_lea.vmem %s5, %s411
      %p413 = scmp.lt.s32.totalorder %s23, 1
      %s414 = scalar_select %p413, %s23, 1
      %p415 = scmp.lt.s32.totalorder %s24, 0
      %s416 = scalar_select %p415, %s24, 0
      %s417 = sadd.s32 %s416, %s414
      %s418 = scalar_lea.vmem %s6, %s417
      %p419 = scmp.eq.s32.totalorder %s25, 0
      // Predicated region
      $region33: #{miou_loss_2d.1} parent=31 // pred_check
        %p420 = pneg %p419
      $region34: #{miou_loss_2d.1} parent=31 // pred_check_branch
        %422 = sbr.rel (%p420) target = $region36
      $region35: #{miou_loss_2d.1} parent=31 // pred_region
        %423 = vst [vmem:[#allocation2] sm:$0xff] 0.0
        %424 = vst [vmem:[#allocation3] sm:$0xff] 0.0
        %v425 = vlaneseq
        %vm426 = vcmp.ge.s32.totalorder %v425, 0
        %vm427 = vcmp.lt.s32.totalorder %v425, 256
        %vm428 = vmand %vm426, %vm427
        %429 = vst.msk [vmem:[#allocation4] sm:$0x3] %vm428, 0.0
        %430 = vst.msk [vmem:[#allocation5] sm:$0x3] %vm428, 0.0
      $region36: #{miou_loss_2d.1} parent=31 // pred_fallthru
        _
      %v431 = vld [vmem:[%s373] sm:$0xff]
      %v432 = vld [vmem:[%s388] sm:$0x3]
      %v433 = vld [vmem:[%s2] sm:$0xf]
      %435 = vst [vmem:[#allocation1] ss:$2 sm:$0xff] %v431
      %v436 = vld.sshfl [vmem:[#allocation1] sm:$0xff pattern:$0x75316420]
      %v437 = vld.sshfl [vmem:[#allocation1 + $0x8] sm:$0xff pattern:$0x75316420]
      %vm440 = vcmask 1043456
      %v441 = vsel %vm440, %v436, -inf
      %v442 = vrot.slane %v441, 4
      %v443 = vmax.f32 %v441, %v442
      %v444 = vrot.slane %v443, 2
      %v445 = vmax.f32 %v443, %v444
      %v446 = vrot.slane %v445, 1
      %v447 = vmax.f32 %v445, %v446
      %v448 = vsel %vm440, %v437, -inf
      %v449 = vrot.slane %v448, 4
      %v450 = vmax.f32 %v448, %v449
      %v451 = vrot.slane %v450, 2
      %v452 = vmax.f32 %v450, %v451
      %v453 = vrot.slane %v452, 1
      %v454 = vmax.f32 %v452, %v453
      %v457 = vrot.slane %v454, 4
      %v458 = vsel %vm440, %v447, %v457
      %v460 = vsub.f32 %v431, %v458
      %v461 = vmul.f32 %v460, 1.442695
      %v462 = vpow.pop %v461
      %464 = vst [vmem:[#allocation1] ss:$2 sm:$0xff] %v462
      %v465 = vld.sshfl [vmem:[#allocation1] sm:$0xff pattern:$0x75316420]
      %v466 = vld.sshfl [vmem:[#allocation1 + $0x8] sm:$0xff pattern:$0x75316420]
      %v469 = vsel %vm440, %v465, 0.0
      %v470 = vrot.slane %v469, 4
      %v471 = vadd.f32 %v469, %v470
      %v472 = vrot.slane %v471, 2
      %v473 = vadd.f32 %v471, %v472
      %v474 = vrot.slane %v473, 1
      %v475 = vadd.f32 %v473, %v474
      %v476 = vsel %vm440, %v466, 0.0
      %v477 = vrot.slane %v476, 4
      %v478 = vadd.f32 %v476, %v477
      %v479 = vrot.slane %v478, 2
      %v480 = vadd.f32 %v478, %v479
      %v481 = vrot.slane %v480, 1
      %v482 = vadd.f32 %v480, %v481
      %v483 = vrcp.pop %v475
      %v484 = vrcp.pop %v482
      %v485 = vmul.f32 %v475, %v483
      %v486 = vmul.f32 %v482, %v484
      %v487 = vsub.f32 2.0, %v485
      %v488 = vsub.f32 2.0, %v486
      %v489 = vmul.f32 %v483, %v487
      %v490 = vmul.f32 %v484, %v488
      %v493 = vrot.slane %v490, 4
      %v494 = vsel %vm440, %v489, %v493
      %v496 = vmul.f32 %v462, %v494
      %v497 = vlog2.pop %v475
      %v498 = vmul.f32 %v497, 0.6931472
      %v499 = vlog2.pop %v482
      %v500 = vmul.f32 %v499, 0.6931472
      %v503 = vrot.slane %v500, 4
      %v504 = vsel %vm440, %v498, %v503
      %v506 = vsub.f32 %v460, %v504
      %v507 = vlaneseq
      %v508 = vshrl.u32 %v507, 7
      %v509 = vperm.slane %v432, 0
      %v510 = vperm.slane %v432, 1
      %vm511 = vcmp.eq.s32.totalorder %v508, %v509
      %vm512 = vcmp.eq.s32.totalorder %v508, %v510
      %v513 = vld [vmem:[#allocation2] sm:$0xff]
      %515 = vst [vmem:[#allocation1] ss:$2 sm:$0xff] %v496
      %v516 = vld.sshfl [vmem:[#allocation1] sm:$0xff pattern:$0x75316420]
      %v517 = vld.sshfl [vmem:[#allocation1 + $0x8] sm:$0xff pattern:$0x75316420]
      %v520 = vsel %vm511, %v516, 0.0
      %v521 = vsel %vm512, %v517, 0.0
      %v524 = vrot.slane %v521, 4
      %v525 = vsel %vm440, %v520, %v524
      %v527 = vadd.f32 %v513, %v525
      %528 = vst [vmem:[#allocation2] sm:$0xff] %v527
      %v529 = vld [vmem:[#allocation3] sm:$0xff]
      %530 = vst [vmem:[#allocation1] ss:$2 sm:$0xff] %v496
      %v531 = vld.sshfl [vmem:[#allocation1] sm:$0xff pattern:$0x75316420]
      %v532 = vld.sshfl [vmem:[#allocation1 + $0x8] sm:$0xff pattern:$0x75316420]
      %v535 = vsel %vm511, 1.0, %v531
      %v536 = vsel %vm512, 1.0, %v532
      %v539 = vrot.slane %v536, 4
      %v540 = vsel %vm440, %v535, %v539
      %v542 = vadd.f32 %v529, %v540
      %543 = vst [vmem:[#allocation3] sm:$0xff] %v542
      %545 = vset.pattern.permute.xlu0 0
      %546 = vperm.xlu0 %545, %v433
      %v547 = vpop.permute.xlu0 %546
      %v549 = vsel %vm511, %v547, 0.0
      %v550 = vsel %vm512, %v547, 0.0
      %v551 = vld [vmem:[#allocation4] sm:$0x3]
      %553 = vst [vmem:[#allocation1] ss:$2 sm:$0xff] %v506
      %v554 = vld.sshfl [vmem:[#allocation1] sm:$0xff pattern:$0x75316420]
      %v555 = vld.sshfl [vmem:[#allocation1 + $0x8] sm:$0xff pattern:$0x75316420]
      %v558 = vmul.f32 %v549, %v554
      %v559 = vmul.f32 %v550, %v555
      %v560 = vsel %vm440, %v558, 0.0
      %v561 = vrot.slane %v560, 4
      %v562 = vadd.f32 %v560, %v561
      %v563 = vrot.slane %v562, 2
      %v564 = vadd.f32 %v562, %v563
      %v565 = vrot.slane %v564, 1
      %v566 = vadd.f32 %v564, %v565
      %v567 = vsel %vm440, %v559, 0.0
      %v568 = vrot.slane %v567, 4
      %v569 = vadd.f32 %v567, %v568
      %v570 = vrot.slane %v569, 2
      %v571 = vadd.f32 %v569, %v570
      %v572 = vrot.slane %v571, 1
      %v573 = vadd.f32 %v571, %v572
      %v576 = vrot.slane %v573, 7
      %vm577 = vcmask 1040384
      %v578 = vsel %vm577, %v566, %v576
      %v580 = vadd.f32 %v551, %v578
      %v581 = vlaneseq
      %vm582 = vcmp.ge.s32.totalorder %v581, 0
      %vm583 = vcmp.lt.s32.totalorder %v581, 256
      %vm584 = vmand %vm582, %vm583
      %585 = vst.msk [vmem:[#allocation4] sm:$0x3] %vm584, %v580
      %v586 = vld [vmem:[#allocation5] sm:$0x3]
      %v587 = vsel %vm440, %v549, 0.0
      %v588 = vrot.slane %v587, 4
      %v589 = vadd.f32 %v587, %v588
      %v590 = vrot.slane %v589, 2
      %v591 = vadd.f32 %v589, %v590
      %v592 = vrot.slane %v591, 1
      %v593 = vadd.f32 %v591, %v592
      %v594 = vsel %vm440, %v550, 0.0
      %v595 = vrot.slane %v594, 4
      %v596 = vadd.f32 %v594, %v595
      %v597 = vrot.slane %v596, 2
      %v598 = vadd.f32 %v596, %v597
      %v599 = vrot.slane %v598, 1
      %v600 = vadd.f32 %v598, %v599
      %v603 = vrot.slane %v600, 7
      %v604 = vsel %vm577, %v593, %v603
      %v606 = vadd.f32 %v586, %v604
      %607 = vst.msk [vmem:[#allocation5] sm:$0x3] %vm584, %v606
      // Predicated region
      $region37: #{miou_loss_2d.1} parent=31 // pred_check
        %p608 = pneg %p419
      $region38: #{miou_loss_2d.1} parent=31 // pred_check_branch
        %610 = sbr.rel (%p608) target = $region40
      $region39: #{miou_loss_2d.1} parent=31 // pred_region
        %v611 = vld [vmem:[#allocation2] sm:$0xff]
        %613 = vst [vmem:[#allocation1] ss:$2 sm:$0xff] %v611
        %v614 = vld.sshfl [vmem:[#allocation1] sm:$0xff pattern:$0x75316420]
        %v615 = vld.sshfl [vmem:[#allocation1 + $0x8] sm:$0xff pattern:$0x75316420]
        %v618 = vsel %vm440, %v614, 0.0
        %v619 = vsel %vm440, %v615, 0.0
        %v620 = vadd.f32 %v618, %v619
        %621 = vadd.xlane.f32.xlu0 %v620
        %v622 = vpop.xlane.xlu0 %621
        %vm623 = vcmask 3072
        %624 = vst.msk [vmem:[%s399] sm:$0xf] %vm623, %v622
        %v625 = vld [vmem:[#allocation3] sm:$0xff]
        %627 = vst [vmem:[#allocation1] ss:$2 sm:$0xff] %v625
        %v628 = vld.sshfl [vmem:[#allocation1] sm:$0xff pattern:$0x75316420]
        %v629 = vld.sshfl [vmem:[#allocation1 + $0x8] sm:$0xff pattern:$0x75316420]
        %v632 = vsel %vm440, %v628, 0.0
        %v633 = vsel %vm440, %v629, 0.0
        %v634 = vadd.f32 %v632, %v633
        %635 = vadd.xlane.f32.xlu0 %v634
        %v636 = vpop.xlane.xlu0 %635
        %637 = vst.msk [vmem:[%s406] sm:$0xf] %vm623, %v636
        %v638 = vld [vmem:[#allocation4] sm:$0x3]
        %v640 = vperm.slane %v638, 0
        %v641 = vperm.slane %v638, 1
        %v644 = vsel %vm577, %v640, 0.0
        %v645 = vsel %vm577, %v641, 0.0
        %v646 = vadd.f32 %v644, %v645
        %647 = vadd.xlane.f32.xlu0 %v646
        %v648 = vpop.xlane.xlu0 %647
        %v649 = vrot.slane %v648, 4
        %v650 = vadd.f32 %v648, %v649
        %v651 = vrot.slane %v650, 2
        %v652 = vadd.f32 %v650, %v651
        %v653 = vrot.slane %v652, 1
        %v654 = vadd.f32 %v652, %v653
        %s655 = vtos %v654
        %s656 = ssub.f32 0.0, %s655
        %v657 = vstv %s656
        %vm658 = vcmask 0
        %659 = vst.msk [vmem:[%s412] sm:$0x1] %vm658, %v657
        %v660 = vld [vmem:[#allocation5] sm:$0x3]
        %v662 = vperm.slane %v660, 0
        %v663 = vperm.slane %v660, 1
        %v666 = vsel %vm577, %v662, 0.0
        %v667 = vsel %vm577, %v663, 0.0
        %v668 = vadd.f32 %v666, %v667
        %669 = vadd.xlane.f32.xlu0 %v668
        %v670 = vpop.xlane.xlu0 %669
        %v671 = vrot.slane %v670, 4
        %v672 = vadd.f32 %v670, %v671
        %v673 = vrot.slane %v672, 2
        %v674 = vadd.f32 %v672, %v673
        %v675 = vrot.slane %v674, 1
        %v676 = vadd.f32 %v674, %v675
        %s677 = vtos %v676
        %v678 = vstv %s677
        %679 = vst.msk [vmem:[%s418] sm:$0x1] %vm658, %v678
      $region40: #{miou_loss_2d.1} parent=31 // pred_fallthru
        _
      %p680 = scmp.lt.s32.totalorder %s23, 1
      %s681 = scalar_select %p680, %s23, 1
      %p682 = scmp.lt.s32.totalorder %s24, 0
      %s683 = scalar_select %p682, %s24, 0
      %s684 = sadd.s32 %s683, %s681
      %s685 = smul.addr %s684, 4
      %s686 = scalar_lea.vmem %s3, %s685
      %p687 = scmp.lt.s32.totalorder %s23, 1
      %s688 = scalar_select %p687, %s23, 1
      %p689 = scmp.lt.s32.totalorder %s24, 0
      %s690 = scalar_select %p689, %s24, 0
      %s691 = sadd.s32 %s690, %s688
      %s692 = smul.addr %s691, 4
      %s693 = scalar_lea.vmem %s4, %s692
      %p694 = scmp.lt.s32.totalorder %s23, 1
      %s695 = scalar_select %p694, %s23, 1
      %p696 = scmp.lt.s32.totalorder %s24, 0
      %s697 = scalar_select %p696, %s24, 0
      %s698 = sadd.s32 %s697, %s695
      %s699 = scalar_lea.vmem %s5, %s698
      %p700 = scmp.lt.s32.totalorder %s23, 1
      %s701 = scalar_select %p700, %s23, 1
      %p702 = scmp.lt.s32.totalorder %s24, 0
      %s703 = scalar_select %p702, %s24, 0
      %s704 = sadd.s32 %s703, %s701
      %s705 = scalar_lea.vmem %s6, %s704
      // Predicated region
      $region41: #{miou_loss_2d.1} parent=31 // pred_check
        %p706 = pneg %p146
      $region42: #{miou_loss_2d.1} parent=31 // pred_check_branch
        %708 = sbr.rel (%p706) target = $region44
      $region43: #{miou_loss_2d.1} parent=31 // pred_region
        _
      $region44: #{miou_loss_2d.1} parent=31 // pred_fallthru
        _
      // Predicated region
      $region45: #{miou_loss_2d.1} parent=31 // pred_check
        %p709 = pneg %p174
      $region46: #{miou_loss_2d.1} parent=31 // pred_check_branch
        %711 = sbr.rel (%p709) target = $region48
      $region47: #{miou_loss_2d.1} parent=31 // pred_region
        _
      $region48: #{miou_loss_2d.1} parent=31 // pred_fallthru
        _
      // Predicated region
      $region49: #{miou_loss_2d.1} parent=31 // pred_check
        %p712 = pneg %p202
      $region50: #{miou_loss_2d.1} parent=31 // pred_check_branch
        %714 = sbr.rel (%p712) target = $region52
      $region51: #{miou_loss_2d.1} parent=31 // pred_region
        _
      $region52: #{miou_loss_2d.1} parent=31 // pred_fallthru
        _
      // Predicated region
      $region53: #{miou_loss_2d.1} parent=31 // pred_check
        %p715 = pneg %p230
      $region54: #{miou_loss_2d.1} parent=31 // pred_check_branch
        %717 = sbr.rel (%p715) target = $region56
      $region55: #{miou_loss_2d.1} parent=31 // pred_region
        _
      $region56: #{miou_loss_2d.1} parent=31 // pred_fallthru
        _
    $region32: #{miou_loss_2d.1} parent=5 // pred_fallthru
      _
    %p718 = scmp.le.s32.totalorder 2, %s13
    // Predicated region
    $region57: #{miou_loss_2d.1} parent=5 // pred_check
      %p719 = pneg %p718
    $region58: #{miou_loss_2d.1} parent=5 // pred_check_branch
      %721 = sbr.rel (%p719) target = $region60
    $region59: #{miou_loss_2d.1} parent=5 // pred_region
      %s722 = ssub.s32 %s13, 2
      // Predicated region
      $region61: #{miou_loss_2d.1} parent=59 // pred_check
        %p723 = pneg %p152
      $region62: #{miou_loss_2d.1} parent=59 // pred_check_branch
        %725 = sbr.rel (%p723) target = $region64
      $region63: #{miou_loss_2d.1} parent=59 // pred_region
        %p726 = scmp.lt.s32.totalorder %s26, 1
        %s727 = scalar_select %p726, %s26, 1
        %p728 = scmp.lt.s32.totalorder %s27, 0
        %s729 = scalar_select %p728, %s27, 0
        %s730 = sadd.s32 %s729, %s727
        %s731 = smul.addr %s730, 4
        %s732 = scalar_lea.vmem %s3, %s731
      $region64: #{miou_loss_2d.1} parent=59 // pred_fallthru
        _
      // Predicated region
      $region65: #{miou_loss_2d.1} parent=59 // pred_check
        %p733 = pneg %p180
      $region66: #{miou_loss_2d.1} parent=59 // pred_check_branch
        %735 = sbr.rel (%p733) target = $region68
      $region67: #{miou_loss_2d.1} parent=59 // pred_region
        %p736 = scmp.lt.s32.totalorder %s26, 1
        %s737 = scalar_select %p736, %s26, 1
        %p738 = scmp.lt.s32.totalorder %s27, 0
        %s739 = scalar_select %p738, %s27, 0
        %s740 = sadd.s32 %s739, %s737
        %s741 = smul.addr %s740, 4
        %s742 = scalar_lea.vmem %s4, %s741
      $region68: #{miou_loss_2d.1} parent=59 // pred_fallthru
        _
      // Predicated region
      $region69: #{miou_loss_2d.1} parent=59 // pred_check
        %p743 = pneg %p208
      $region70: #{miou_loss_2d.1} parent=59 // pred_check_branch
        %745 = sbr.rel (%p743) target = $region72
      $region71: #{miou_loss_2d.1} parent=59 // pred_region
        %p746 = scmp.lt.s32.totalorder %s26, 1
        %s747 = scalar_select %p746, %s26, 1
        %p748 = scmp.lt.s32.totalorder %s27, 0
        %s749 = scalar_select %p748, %s27, 0
        %s750 = sadd.s32 %s749, %s747
        %s751 = scalar_lea.vmem %s5, %s750
      $region72: #{miou_loss_2d.1} parent=59 // pred_fallthru
        _
      // Predicated region
      $region73: #{miou_loss_2d.1} parent=59 // pred_check
        %p752 = pneg %p236
      $region74: #{miou_loss_2d.1} parent=59 // pred_check_branch
        %754 = sbr.rel (%p752) target = $region76
      $region75: #{miou_loss_2d.1} parent=59 // pred_region
        %p755 = scmp.lt.s32.totalorder %s26, 1
        %s756 = scalar_select %p755, %s26, 1
        %p757 = scmp.lt.s32.totalorder %s27, 0
        %s758 = scalar_select %p757, %s27, 0
        %s759 = sadd.s32 %s758, %s756
        %s760 = scalar_lea.vmem %s6, %s759
      $region76: #{miou_loss_2d.1} parent=59 // pred_fallthru
        _
    $region60: #{miou_loss_2d.1} parent=5 // pred_fallthru
      _
  $region6: #{miou_loss_2d.1} parent=0 // loop_footer
    %s17 = sadd.s32 1, %s13
  $region7: #{miou_loss_2d.1} parent=0 // loop_footer_branch
    %12 = sbr.rel target = $region3
  $region8: #{miou_loss_2d.1} parent=0 // loop_exit
    _

</llo_original>
